<compile_context>
chip_gen: v7x
topology: tpu7x:2x2x1
jax: 0.10.0
libtpu: 0.0.40
codegen_flags: <defaults>
</compile_context>

<pallas_src>
import functools

import jax
import jax.numpy as jnp
from jax.experimental import pallas as pl
from jax.experimental.pallas import tpu as pltpu

_MiB = 1024 * 1024
_VMEM_BLOCK_BUDGET = 40 * _MiB   # double-buffered block budget (fits v7x 64 MiB)
_VMEM_LIMIT_CAP = 48 * _MiB      # never request more scoped VMEM than this


def _round_up(x, m):
    return ((x + m - 1) // m) * m


def _choose_tile(dim, max_tile, align):
    """Largest tile <= max_tile that is a multiple of `align` and divides
    `dim`; falls back to the full dim (a full-extent block is always legal)."""
    if dim <= max_tile:
        return dim
    t = (max_tile // align) * align
    while t >= align:
        if dim % t == 0:
            return t
        t -= align
    return dim


def _vmem_limit(block_bytes):
    """Scoped-VMEM request: actual block footprint + headroom, clamped so it
    is valid on every generation (v5e 128 MiB ... v7x 64 MiB physical)."""
    return int(min(_VMEM_LIMIT_CAP, max(16 * _MiB, block_bytes + 8 * _MiB)))


# ---------------------------------------------------------------------------
# Stage 1: tap sums  x (B, L, Cin) -> S (B, w*Cin)  (k-major columns)
# ---------------------------------------------------------------------------
def _tapsum_kernel(x_ref, s_ref, *, T, w):
    # x_ref: (tb, L, Cin); s_ref: (tb, w*Cin).  Running-sum recurrence:
    #   s_0 = sum_{t=0}^{T-1} x[:, t, :]
    #   s_k = s_{k-1} - x[:, k-1, :] + x[:, k-1+T, :]
    # -> T + 2*(w-1) row adds instead of w*T.
    cin = x_ref.shape[-1]                      # multiple of 128 on this path
    s = jnp.sum(x_ref[:, 0:T, :].astype(jnp.float32), axis=1)      # (tb, Cin)
    s_ref[:, 0:cin] = s.astype(s_ref.dtype)    # lane-aligned dense store
    for k in range(1, w):                      # w is small & static -> unrolled
        s = (s - x_ref[:, k - 1, :].astype(jnp.float32)
               + x_ref[:, k - 1 + T, :].astype(jnp.float32))
        s_ref[:, k * cin:(k + 1) * cin] = s.astype(s_ref.dtype)


# ---------------------------------------------------------------------------
# Stage 2: fused (B, K_pad) @ (K_pad, Cout_pad) + bias
# ---------------------------------------------------------------------------
def _matmul_bias_kernel(s_ref, w_ref, b_ref, o_ref, acc_ref):
    # s_ref: (tb, tk), w_ref: (tk, tn), b_ref: (1, tn) f32, o_ref: (tb, tn)
    k = pl.program_id(2)

    @pl.when(k == 0)
    def _():
        acc_ref[...] = jnp.zeros_like(acc_ref)

    acc_ref[...] += jnp.dot(s_ref[...], w_ref[...],
                            preferred_element_type=jnp.float32)

    @pl.when(k == pl.num_programs(2) - 1)
    def _():
        # 1/T is already folded into the weights; bias is f32.
        o_ref[...] = (acc_ref[...] + b_ref[...]).astype(o_ref.dtype)


# ---------------------------------------------------------------------------
# One-time (model-init) parameter re-layout
# ---------------------------------------------------------------------------
def prepare_seqnet_params(weight, bias, seqL, *, compute_dtype=jnp.bfloat16):
    """weight: (outDims, inDims, w), bias: (outDims,).
    Returns:
      w2: (K_pad, Cout_pad) compute_dtype, k-major rows, scaled by 1/T,
          zero-padded to multiples of 128 on both axes.
      b2: (1, Cout_pad) f32 (unscaled)."""
    out_dims, in_dims, w = weight.shape
    T = seqL - w + 1
    assert T >= 1, "sequence length must be >= kernel width"
    K = w * in_dims
    K_pad = _round_up(K, 128)
    cout_pad = _round_up(out_dims, 128)
    w2 = (jnp.transpose(weight, (2, 1, 0)).astype(jnp.float32) / T)
    w2 = w2.reshape(K, out_dims)
    w2 = jnp.pad(w2, ((0, K_pad - K), (0, cout_pad - out_dims)))
    w2 = w2.astype(compute_dtype)
    b2 = jnp.pad(bias.astype(jnp.float32), (0, cout_pad - out_dims))
    return w2, b2.reshape(1, cout_pad)


# ---------------------------------------------------------------------------
# Forward
# ---------------------------------------------------------------------------
def seqnet_forward(x, w2, b2, *, w, out_dims):
    """x: (B, seqL, inDims) or (B, inDims); w2/b2 from prepare_seqnet_params.
    Returns (B, out_dims), same math as PyTorch seqNet.forward."""
    if x.ndim < 3:
        x = x[:, None, :]                       # mirrors x.unsqueeze(1)
    B, L, Cin = x.shape
    K = w * Cin
    K_pad, Cout_pad = w2.shape
    assert K_pad == _round_up(K, 128), "weight layout does not match (w, inDims)"
    assert Cout_pad == b2.shape[1]
    T = L - w + 1
    assert T >= 1, "sequence length must be >= kernel width"

    c_dtype = w2.dtype
    c_bytes = jnp.dtype(c_dtype).itemsize
    x_bytes = jnp.dtype(x.dtype).itemsize
    o_bytes = x_bytes                           # output keeps x's dtype

    # ---- stage 1: per-tap window sums, written directly as (B, K_pad) ----
    if Cin % 128 == 0:
        # Pallas path: lane-aligned dense stores, no relayout afterwards.
        row1 = L * Cin * x_bytes + K_pad * c_bytes
        max_tb1 = max(8, ((_VMEM_BLOCK_BUDGET // 2) // max(row1, 1)) // 8 * 8)
        tb1 = _choose_tile(B, max_tb1, 8)
        fp1 = 2 * tb1 * row1
        s2 = pl.pallas_call(
            functools.partial(_tapsum_kernel, T=T, w=w),
            out_shape=jax.ShapeDtypeStruct((B, K_pad), c_dtype),
            grid=(B // tb1,),
            in_specs=[pl.BlockSpec((tb1, L, Cin), lambda i: (i, 0, 0))],
            out_specs=pl.BlockSpec((tb1, K_pad), lambda i: (i, 0)),
            compiler_params=pltpu.CompilerParams(
                dimension_semantics=("parallel",),
                vmem_limit_bytes=_vmem_limit(fp1)),
        )(x)
    else:
        # Small / unaligned Cin: lane-sparse Pallas stage is not worth the
        # dispatch -- tiny reduction done with plain XLA ops (f32 accum).
        xf = x.astype(jnp.float32)
        taps = [jnp.sum(xf[:, k:k + T, :], axis=1) for k in range(w)]
        s2 = jnp.concatenate(taps, axis=-1)             # (B, K), k-major
        if K_pad > K:
            s2 = jnp.pad(s2, ((0, 0), (0, K_pad - K)))
        s2 = s2.astype(c_dtype)

    # ---- stage 2: fused (B, K_pad) @ (K_pad, Cout_pad) + bias, tiled ----
    # K_pad / Cout_pad are multiples of 128, so these always find a legal
    # 128-multiple tile (no full-dim fallback that could blow VMEM).
    tn = _choose_tile(Cout_pad, 1024, 128)
    tk = _choose_tile(K_pad, 1024, 128)
    # Prefer covering all of B in one tile (W2 streamed from HBM exactly
    # once); shrink by halving only if the explicit VMEM budget is exceeded.
    w_blk = 2 * tk * tn * c_bytes + 2 * 8 * tn * 4          # W tile + bias
    row2 = 2 * tk * c_bytes + 2 * tn * o_bytes + tn * 4     # S + out + acc
    tb = B
    while tb > 8 and (w_blk + tb * row2) > _VMEM_BLOCK_BUDGET:
        half = tb // 2
        if B % half == 0 and half % 8 == 0:
            tb = half
        else:
            break
    fp2 = w_blk + tb * row2

    grid = (B // tb, Cout_pad // tn, K_pad // tk)
    # On v7x megacore, make the 2-TensorCore split land on Cout (each core
    # streams only half of W2) rather than on B (which would duplicate the
    # bottleneck weight traffic).
    b_sem = "arbitrary" if grid[1] > 1 else "parallel"

    out = pl.pallas_call(
        _matmul_bias_kernel,
        out_shape=jax.ShapeDtypeStruct((B, Cout_pad), x.dtype),
        grid=grid,
        in_specs=[
            pl.BlockSpec((tb, tk), lambda i, j, k: (i, k)),
            pl.BlockSpec((tk, tn), lambda i, j, k: (k, j)),
            pl.BlockSpec((1, tn), lambda i, j, k: (0, j)),
        ],
        out_specs=pl.BlockSpec((tb, tn), lambda i, j, k: (i, j)),
        scratch_shapes=[pltpu.VMEM((tb, tn), jnp.float32)],
        compiler_params=pltpu.CompilerParams(
            dimension_semantics=(b_sem, "parallel", "arbitrary"),
            vmem_limit_bytes=_vmem_limit(fp2)),
    )(s2, w2, b2)

    return out[:, :out_dims]


# ---------------------------------------------------------------------------
# Pure-JAX reference (replicates the PyTorch forward exactly)
# ---------------------------------------------------------------------------
def _reference_forward(x, weight, bias, *, w):
    if x.ndim < 3:
        x = x[:, None, :]
    xc = jnp.transpose(x, (0, 2, 1)).astype(jnp.float32)        # (B, Cin, L)
    out = jax.lax.conv_general_dilated(
        xc, weight.astype(jnp.float32),
        window_strides=(1,), padding="VALID",
        dimension_numbers=("NCH", "OIH", "NCH"),
        precision=jax.lax.Precision.HIGHEST)                     # (B, Cout, T)
    out = out + bias.reshape(1, -1, 1)
    return jnp.mean(out, axis=-1)                                # (B, Cout)


if __name__ == "__main__":
    key = jax.random.PRNGKey(0)

    def run_case(tag, B, seqL, inDims, outDims, w, compute_dtype, atol, rtol):
        kx, kw, kb = jax.random.split(jax.random.fold_in(key, inDims), 3)
        x = jax.random.normal(kx, (B, seqL, inDims), dtype=jnp.float32)
        # deterministic Conv1d-style init (uniform in +/- 1/sqrt(inDims*w))
        bound = 1.0 / jnp.sqrt(jnp.float32(inDims * w))
        weight = jax.random.uniform(kw, (outDims, inDims, w),
                                    minval=-bound, maxval=bound,
                                    dtype=jnp.float32)
        bias = jax.random.uniform(kb, (outDims,),
                                  minval=-bound, maxval=bound,
                                  dtype=jnp.float32)
        # one-time parameter re-layout (model init), hoisted off the hot path
        w2, b2 = prepare_seqnet_params(weight, bias, seqL,
                                       compute_dtype=compute_dtype)
        out = jax.block_until_ready(
            seqnet_forward(x, w2, b2, w=w, out_dims=outDims))
        ref = jax.block_until_ready(_reference_forward(x, weight, bias, w=w))
        assert out.shape == (B, outDims), tag
        assert jnp.allclose(out.astype(jnp.float32), ref,
                            atol=atol, rtol=rtol), f"mismatch vs reference ({tag})"

    # lane-aligned Cin -> exercises the Pallas tap-sum kernel + fused matmul
    run_case("f32-aligned", B=2, seqL=10, inDims=128, outDims=64, w=5,
             compute_dtype=jnp.float32, atol=1e-4, rtol=1e-4)
    # bf16 weight/S stream (the recommended production config), f32 accum
    run_case("bf16-aligned", B=2, seqL=10, inDims=128, outDims=64, w=5,
             compute_dtype=jnp.bfloat16, atol=5e-2, rtol=5e-2)
    # small unaligned Cin -> XLA tap-sum fallback + padded K in the matmul
    run_case("f32-small", B=2, seqL=10, inDims=16, outDims=32, w=5,
             compute_dtype=jnp.float32, atol=1e-4, rtol=1e-4)

    print("KERNEL_OK")
</pallas_src>

<mosaic_0001>
module attributes {stable_mosaic.version = 11 : i64} {
  func.func @_tapsum_kernel(%arg0: i32, %arg1: memref<2x10x128xf32, #tpu.memory_space<vmem>>, %arg2: memref<2x640xf32, #tpu.memory_space<vmem>>) attributes {dimension_semantics = [#tpu.dimension_semantics<parallel>], iteration_bounds = array<i64: 1>, scalar_prefetch = 0 : i64, scratch_operands = 0 : i64, tpu.core_type = #tpu.core_type<tc>, window_params = [{transform_indices = @transform_0, window_bounds = array<i64: 2, 10, 128>}, {transform_indices = @transform_1, window_bounds = array<i64: 2, 640>}]} {
    %c0 = arith.constant 0 : index
    %c0_0 = arith.constant 0 : index
    %c0_1 = arith.constant 0 : index
    %0 = vector.load %arg1[%c0, %c0_0, %c0_1] : memref<2x10x128xf32, #tpu.memory_space<vmem>>, vector<2x6x128xf32>
    %cst = arith.constant dense<0.000000e+00> : vector<2x128xf32>
    %1 = vector.multi_reduction <add>, %0, %cst [1] : vector<2x6x128xf32> to vector<2x128xf32>
    %c0_2 = arith.constant 0 : index
    %c0_3 = arith.constant 0 : index
    %2 = vector.load %arg2[%c0_2, %c0_3] : memref<2x640xf32, #tpu.memory_space<vmem>>, vector<2x128xf32>
    tpu.vector_store %arg2[%c0_2, %c0_3], %1 {strides = array<i32>} : memref<2x640xf32, #tpu.memory_space<vmem>>, vector<2x128xf32>,
    %c0_4 = arith.constant 0 : index
    %c0_5 = arith.constant 0 : index
    %c0_6 = arith.constant 0 : index
    %3 = vector.load %arg1[%c0_4, %c0_5, %c0_6] : memref<2x10x128xf32, #tpu.memory_space<vmem>>, vector<2x1x128xf32>
    %4 = vector.shape_cast %3 : vector<2x1x128xf32> to vector<2x128xf32>
    %5 = arith.subf %1, %4 : vector<2x128xf32>
    %c0_7 = arith.constant 0 : index
    %c6 = arith.constant 6 : index
    %c0_8 = arith.constant 0 : index
    %6 = vector.load %arg1[%c0_7, %c6, %c0_8] : memref<2x10x128xf32, #tpu.memory_space<vmem>>, vector<2x1x128xf32>
    %7 = vector.shape_cast %6 : vector<2x1x128xf32> to vector<2x128xf32>
    %8 = arith.addf %5, %7 : vector<2x128xf32>
    %c0_9 = arith.constant 0 : index
    %c128 = arith.constant 128 : index
    %9 = vector.load %arg2[%c0_9, %c128] : memref<2x640xf32, #tpu.memory_space<vmem>>, vector<2x128xf32>
    tpu.vector_store %arg2[%c0_9, %c128], %8 {strides = array<i32>} : memref<2x640xf32, #tpu.memory_space<vmem>>, vector<2x128xf32>,
    %c0_10 = arith.constant 0 : index
    %c1 = arith.constant 1 : index
    %c0_11 = arith.constant 0 : index
    %10 = vector.load %arg1[%c0_10, %c1, %c0_11] : memref<2x10x128xf32, #tpu.memory_space<vmem>>, vector<2x1x128xf32>
    %11 = vector.shape_cast %10 : vector<2x1x128xf32> to vector<2x128xf32>
    %12 = arith.subf %8, %11 : vector<2x128xf32>
    %c0_12 = arith.constant 0 : index
    %c7 = arith.constant 7 : index
    %c0_13 = arith.constant 0 : index
    %13 = vector.load %arg1[%c0_12, %c7, %c0_13] : memref<2x10x128xf32, #tpu.memory_space<vmem>>, vector<2x1x128xf32>
    %14 = vector.shape_cast %13 : vector<2x1x128xf32> to vector<2x128xf32>
    %15 = arith.addf %12, %14 : vector<2x128xf32>
    %c0_14 = arith.constant 0 : index
    %c256 = arith.constant 256 : index
    %16 = vector.load %arg2[%c0_14, %c256] : memref<2x640xf32, #tpu.memory_space<vmem>>, vector<2x128xf32>
    tpu.vector_store %arg2[%c0_14, %c256], %15 {strides = array<i32>} : memref<2x640xf32, #tpu.memory_space<vmem>>, vector<2x128xf32>,
    %c0_15 = arith.constant 0 : index
    %c2 = arith.constant 2 : index
    %c0_16 = arith.constant 0 : index
    %17 = vector.load %arg1[%c0_15, %c2, %c0_16] : memref<2x10x128xf32, #tpu.memory_space<vmem>>, vector<2x1x128xf32>
    %18 = vector.shape_cast %17 : vector<2x1x128xf32> to vector<2x128xf32>
    %19 = arith.subf %15, %18 : vector<2x128xf32>
    %c0_17 = arith.constant 0 : index
    %c8 = arith.constant 8 : index
    %c0_18 = arith.constant 0 : index
    %20 = vector.load %arg1[%c0_17, %c8, %c0_18] : memref<2x10x128xf32, #tpu.memory_space<vmem>>, vector<2x1x128xf32>
    %21 = vector.shape_cast %20 : vector<2x1x128xf32> to vector<2x128xf32>
    %22 = arith.addf %19, %21 : vector<2x128xf32>
    %c0_19 = arith.constant 0 : index
    %c384 = arith.constant 384 : index
    %23 = vector.load %arg2[%c0_19, %c384] : memref<2x640xf32, #tpu.memory_space<vmem>>, vector<2x128xf32>
    tpu.vector_store %arg2[%c0_19, %c384], %22 {strides = array<i32>} : memref<2x640xf32, #tpu.memory_space<vmem>>, vector<2x128xf32>,
    %c0_20 = arith.constant 0 : index
    %c3 = arith.constant 3 : index
    %c0_21 = arith.constant 0 : index
    %24 = vector.load %arg1[%c0_20, %c3, %c0_21] : memref<2x10x128xf32, #tpu.memory_space<vmem>>, vector<2x1x128xf32>
    %25 = vector.shape_cast %24 : vector<2x1x128xf32> to vector<2x128xf32>
    %26 = arith.subf %22, %25 : vector<2x128xf32>
    %c0_22 = arith.constant 0 : index
    %c9 = arith.constant 9 : index
    %c0_23 = arith.constant 0 : index
    %27 = vector.load %arg1[%c0_22, %c9, %c0_23] : memref<2x10x128xf32, #tpu.memory_space<vmem>>, vector<2x1x128xf32>
    %28 = vector.shape_cast %27 : vector<2x1x128xf32> to vector<2x128xf32>
    %29 = arith.addf %26, %28 : vector<2x128xf32>
    %c0_24 = arith.constant 0 : index
    %c512 = arith.constant 512 : index
    %30 = vector.load %arg2[%c0_24, %c512] : memref<2x640xf32, #tpu.memory_space<vmem>>, vector<2x128xf32>
    tpu.vector_store %arg2[%c0_24, %c512], %29 {strides = array<i32>} : memref<2x640xf32, #tpu.memory_space<vmem>>, vector<2x128xf32>,
    return
  }
  func.func @transform_0(%arg0: i32) -> (i32, i32, i32) {
    %c0_i32 = arith.constant 0 : i32
    %c0_i32_0 = arith.constant 0 : i32
    %c0_i32_1 = arith.constant 0 : i32
    return %arg0, %c0_i32, %c0_i32_0 : i32, i32, i32
  }
  func.func @transform_1(%arg0: i32) -> (i32, i32) {
    %c0_i32 = arith.constant 0 : i32
    %c0_i32_0 = arith.constant 0 : i32
    return %arg0, %c0_i32 : i32, i32
  }
}

</mosaic_0001>

<llo_original>
// kernel: tpu_custom_call.1
$region0: #{tpu_custom_call.1}
  #allocation0 [shape = 'u32[]', space=smem, size = 0x4, offset = 0x4, fixed_abs, tag = 'smem constant byte address 0x4 - core index']
  #allocation1 [shape = 'u32[144,128]{1,0:T(1,128)}', space=vmem, size = 0x12000, scoped, tag = 'internal scratch']
  %s0 = inlined_call_operand.vmem [shape: f32[2,10,128], index: 0, kind: input, shape index: {}]
  %s1 = inlined_call_operand.hbm [shape: f32[2,640], index: 1, kind: output, shape index: {}]
  %s2 = sld [smem:[#allocation0]]
  $region14: #{tpu_custom_call.1} parent=0
    _
  %s4 = ssub.s32 1, %s2
  %s5 = scalar_select 0, %s4, %s2
  $region1: #{tpu_custom_call.1} parent=0
    #allocation2 [shape = 'u8[5120]{0}', space=vmem, size = 0x1400, scoped, tag = 'output window, operand 0, single buffered']
    #allocation3 [shape = 's32[1]{0}', space=sflag, size = 0x4, scoped, tag = 'scoped memory for tpu_custom_call.1']
    %6 = vsyncpa [#allocation3], 0
    // Predicated region
    $region2: #{tpu_custom_call.1} parent=1 // pred_check
      _
    $region3: #{tpu_custom_call.1} parent=1 // pred_check_branch
      %8 = sbr.rel (0) target = $region5
    $region4: #{tpu_custom_call.1} parent=1 // pred_region
      _
    $region5: #{tpu_custom_call.1} parent=1 // pred_fallthru
      _
    %v9 = vld [vmem:[%s0] sm:$0x3f]
    %v10 = vld [vmem:[%s0 + $0x10] sm:$0x3f]
    %vm11 = vcmask 1045504
    %v12 = vsel %vm11, %v9, 0.0
    %v13 = vrot.slane %v12, 4
    %v14 = vadd.f32 %v12, %v13
    %v15 = vrot.slane %v14, 2
    %v16 = vadd.f32 %v14, %v15
    %v17 = vrot.slane %v16, 1
    %v18 = vadd.f32 %v16, %v17
    %v19 = vsel %vm11, %v10, 0.0
    %v20 = vrot.slane %v19, 4
    %v21 = vadd.f32 %v19, %v20
    %v22 = vrot.slane %v21, 2
    %v23 = vadd.f32 %v21, %v22
    %v24 = vrot.slane %v23, 1
    %v25 = vadd.f32 %v23, %v24
    %v29 = vunpack.c.l.s4 1983009808
    %v30 = vunpack.c.0.s8 %v29
    %v31 = vlaneseq
    %v32 = vshrl.u32 %v31, 7
    %v33 = vsub.s32 %v30, %v32
    %v34 = vrot.slane %v18, %v33
    %v36 = vunpack.c.l.s4 1983009808
    %v37 = vunpack.c.0.s8 %v36
    %v38 = vlaneseq
    %v39 = vshrl.u32 %v38, 7
    %v40 = vsub.s32 %v37, %v39
    %v41 = vrot.slane %v25, %v40
    %vm42 = vcmask 1044484
    %v43 = vsel %vm42, %v34, %v34
    %vm44 = vcmask 1046534
    %v45 = vsel %vm44, %v34, %v43
    %v46 = vrot.slane %v41, 7
    %vm47 = vcmask 1041409
    %v48 = vsel %vm47, %v46, %v45
    %vm49 = vcmask 1043459
    %v50 = vsel %vm49, %v46, %v48
    %vm51 = vcmask 1045509
    %v52 = vsel %vm51, %v46, %v50
    %vm53 = vcmask 1047559
    %v54 = vsel %vm53, %v46, %v52
    %56 = vst [vmem:[#allocation2] sm:$0x3] %v54
    %v57 = vld [vmem:[%s0] sm:$0x1]
    %v58 = vld [vmem:[%s0 + $0x10] sm:$0x1]
    %v59 = vsub.f32 %v18, %v57
    %v60 = vsub.f32 %v25, %v58
    %v61 = vld [vmem:[%s0 + $0x6] sm:$0x1]
    %v62 = vld [vmem:[%s0 + $0x16] sm:$0x1]
    %v63 = vadd.f32 %v59, %v61
    %v64 = vadd.f32 %v60, %v62
    %v68 = vunpack.c.l.s4 1983009808
    %v69 = vunpack.c.0.s8 %v68
    %v70 = vlaneseq
    %v71 = vshrl.u32 %v70, 7
    %v72 = vsub.s32 %v69, %v71
    %v73 = vrot.slane %v63, %v72
    %v75 = vunpack.c.l.s4 1983009808
    %v76 = vunpack.c.0.s8 %v75
    %v77 = vlaneseq
    %v78 = vshrl.u32 %v77, 7
    %v79 = vsub.s32 %v76, %v78
    %v80 = vrot.slane %v64, %v79
    %v81 = vsel %vm42, %v73, %v73
    %v82 = vsel %vm44, %v73, %v81
    %v83 = vrot.slane %v80, 7
    %v84 = vsel %vm47, %v83, %v82
    %v85 = vsel %vm49, %v83, %v84
    %v86 = vsel %vm51, %v83, %v85
    %v87 = vsel %vm53, %v83, %v86
    %89 = vst [vmem:[#allocation2 + $0x2] sm:$0x3] %v87
    %v90 = vld [vmem:[%s0 + $0x1] sm:$0x1]
    %v91 = vld [vmem:[%s0 + $0x11] sm:$0x1]
    %v92 = vsub.f32 %v63, %v90
    %v93 = vsub.f32 %v64, %v91
    %v94 = vld [vmem:[%s0 + $0x7] sm:$0x1]
    %v95 = vld [vmem:[%s0 + $0x17] sm:$0x1]
    %v96 = vadd.f32 %v92, %v94
    %v97 = vadd.f32 %v93, %v95
    %v101 = vunpack.c.l.s4 1983009808
    %v102 = vunpack.c.0.s8 %v101
    %v103 = vlaneseq
    %v104 = vshrl.u32 %v103, 7
    %v105 = vsub.s32 %v102, %v104
    %v106 = vrot.slane %v96, %v105
    %v108 = vunpack.c.l.s4 1983009808
    %v109 = vunpack.c.0.s8 %v108
    %v110 = vlaneseq
    %v111 = vshrl.u32 %v110, 7
    %v112 = vsub.s32 %v109, %v111
    %v113 = vrot.slane %v97, %v112
    %v114 = vsel %vm42, %v106, %v106
    %v115 = vsel %vm44, %v106, %v114
    %v116 = vrot.slane %v113, 7
    %v117 = vsel %vm47, %v116, %v115
    %v118 = vsel %vm49, %v116, %v117
    %v119 = vsel %vm51, %v116, %v118
    %v120 = vsel %vm53, %v116, %v119
    %122 = vst [vmem:[#allocation2 + $0x4] sm:$0x3] %v120
    %v123 = vld [vmem:[%s0 + $0x2] sm:$0x1]
    %v124 = vld [vmem:[%s0 + $0x12] sm:$0x1]
    %v125 = vsub.f32 %v96, %v123
    %v126 = vsub.f32 %v97, %v124
    %v127 = vld [vmem:[%s0 + $0x8] sm:$0x1]
    %v128 = vld [vmem:[%s0 + $0x18] sm:$0x1]
    %v129 = vadd.f32 %v125, %v127
    %v130 = vadd.f32 %v126, %v128
    %v134 = vunpack.c.l.s4 1983009808
    %v135 = vunpack.c.0.s8 %v134
    %v136 = vlaneseq
    %v137 = vshrl.u32 %v136, 7
    %v138 = vsub.s32 %v135, %v137
    %v139 = vrot.slane %v129, %v138
    %v141 = vunpack.c.l.s4 1983009808
    %v142 = vunpack.c.0.s8 %v141
    %v143 = vlaneseq
    %v144 = vshrl.u32 %v143, 7
    %v145 = vsub.s32 %v142, %v144
    %v146 = vrot.slane %v130, %v145
    %v147 = vsel %vm42, %v139, %v139
    %v148 = vsel %vm44, %v139, %v147
    %v149 = vrot.slane %v146, 7
    %v150 = vsel %vm47, %v149, %v148
    %v151 = vsel %vm49, %v149, %v150
    %v152 = vsel %vm51, %v149, %v151
    %v153 = vsel %vm53, %v149, %v152
    %155 = vst [vmem:[#allocation2 + $0x6] sm:$0x3] %v153
    %v156 = vld [vmem:[%s0 + $0x3] sm:$0x1]
    %v157 = vld [vmem:[%s0 + $0x13] sm:$0x1]
    %v158 = vsub.f32 %v129, %v156
    %v159 = vsub.f32 %v130, %v157
    %v160 = vld [vmem:[%s0 + $0x9] sm:$0x1]
    %v161 = vld [vmem:[%s0 + $0x19] sm:$0x1]
    %v162 = vadd.f32 %v158, %v160
    %v163 = vadd.f32 %v159, %v161
    %v167 = vunpack.c.l.s4 1983009808
    %v168 = vunpack.c.0.s8 %v167
    %v169 = vlaneseq
    %v170 = vshrl.u32 %v169, 7
    %v171 = vsub.s32 %v168, %v170
    %v172 = vrot.slane %v162, %v171
    %v174 = vunpack.c.l.s4 1983009808
    %v175 = vunpack.c.0.s8 %v174
    %v176 = vlaneseq
    %v177 = vshrl.u32 %v176, 7
    %v178 = vsub.s32 %v175, %v177
    %v179 = vrot.slane %v163, %v178
    %v180 = vsel %vm42, %v172, %v172
    %v181 = vsel %vm44, %v172, %v180
    %v182 = vrot.slane %v179, 7
    %v183 = vsel %vm47, %v182, %v181
    %v184 = vsel %vm49, %v182, %v183
    %v185 = vsel %vm51, %v182, %v184
    %v186 = vsel %vm53, %v182, %v185
    %188 = vst [vmem:[#allocation2 + $0x8] sm:$0x3] %v186
    // Predicated region
    $region6: #{tpu_custom_call.1} parent=1 // pred_check
      _
    $region7: #{tpu_custom_call.1} parent=1 // pred_check_branch
      %190 = sbr.rel (0) target = $region9
    $region8: #{tpu_custom_call.1} parent=1 // pred_region
      %s192 = ssub.s32 160, 160
      %193 = vsyncadd [#allocation3], %s192
      %s195 = sshll.u32 [#allocation2], 4
      %s196 = int_to_ptr.vmem [resolvable:$true] %s195
      %198 = dma.vmem_to_hbm [thread:$0]  %s196, 160, %s1, [#allocation3]
    $region9: #{tpu_custom_call.1} parent=1 // pred_fallthru
      _
    // Predicated region
    $region10: #{tpu_custom_call.1} parent=1 // pred_check
      _
    $region11: #{tpu_custom_call.1} parent=1 // pred_check_branch
      %200 = sbr.rel (0) target = $region13
    $region12: #{tpu_custom_call.1} parent=1 // pred_region
      %201 = dma.done [#allocation3], 160
    $region13: #{tpu_custom_call.1} parent=1 // pred_fallthru
      _
    %202 = vsyncpa [#allocation3], 1

</llo_original>
